<compile_context>
chip_gen: v7x
topology: tpu7x:2x2x1
jax: 0.10.0
libtpu: 0.0.40
codegen_flags: <defaults>
</compile_context>

<pallas_src>
import functools
import math

import jax
import jax.numpy as jnp
from jax.experimental import pallas as pl
from jax.experimental.pallas import tpu as pltpu

LANE = 128
MAX_TILE_R = 8192   # rows per grid step: 8192 x 128 f32 = 4 MiB per input per buffer
CHUNK_R = 1024      # rows per in-kernel compute chunk (bounds VMEM intermediates)
LN2 = math.log(2.0)


def _round_up(a, b):
    return ((a + b - 1) // b) * b


def _sublane_multiple(dtype):
    # Minimum second-minor block multiple for a given element width.
    itemsize = jnp.dtype(dtype).itemsize
    return max(8, 32 // max(itemsize, 1))


def _make_kernel(tile_r, chunk_r, rows_valid, ragged):
    """Build a partial-sums kernel accumulating (pos_count, S1, S2) into (3,8,128)."""
    n_full = tile_r // chunk_r
    rem = tile_r % chunk_r

    def accumulate(x_raw, t_raw, base_row, out_ref):
        x = x_raw.astype(jnp.float32)
        t = t_raw.astype(jnp.float32)
        if ragged:
            # Rows at/after `rows_valid` come from the partial last block and
            # hold unspecified data; force them to (x=0, t=0) so each fake
            # element contributes exactly ln(2) to S1 (corrected on the host).
            row = jax.lax.broadcasted_iota(jnp.int32, x.shape, 0) + base_row
            valid = row < rows_valid
            x = jnp.where(valid, x, 0.0)
            t = jnp.where(valid, t, 0.0)
        # stable softplus(-x) = max(-x, 0) + log1p(exp(-|x|)); exp/log1p -> EUP.
        sp = jnp.maximum(-x, 0.0) + jnp.log1p(jnp.exp(-jnp.abs(x)))
        nz = jnp.where(t != 0.0, 1.0, 0.0)   # pos-count term
        s1 = (1.0 - t) * x + sp              # unweighted base term
        s2 = t * sp                          # term scaled by (pos_weight - 1)
        # Fold (chunk, 128) -> (8, 128) with elementwise adds (VPU only); the
        # cross-lane/sublane reduction happens once on the host.
        r8 = x.shape[0] // 8
        out_ref[0] += nz.reshape(r8, 8, LANE).sum(axis=0)
        out_ref[1] += s1.reshape(r8, 8, LANE).sum(axis=0)
        out_ref[2] += s2.reshape(r8, 8, LANE).sum(axis=0)

    def kernel(x_ref, t_ref, out_ref):
        i = pl.program_id(0)

        @pl.when(i == 0)
        def _init():
            out_ref[...] = jnp.zeros_like(out_ref)

        block_row0 = i * tile_r

        if n_full > 0:
            def body(c, carry):
                start = pl.multiple_of(c * chunk_r, chunk_r)
                accumulate(x_ref[pl.ds(start, chunk_r), :],
                           t_ref[pl.ds(start, chunk_r), :],
                           block_row0 + start, out_ref)
                return carry
            jax.lax.fori_loop(0, n_full, body, 0)

        if rem:
            start = n_full * chunk_r
            accumulate(x_ref[pl.ds(start, rem), :],
                       t_ref[pl.ds(start, rem), :],
                       block_row0 + start, out_ref)

    return kernel


@functools.partial(
    jax.jit, static_argnames=("reduction", "max_tile_rows", "chunk_rows"))
def w_bce_with_logits_loss(inputs, target, reduction="mean", *,
                           max_tile_rows=MAX_TILE_R, chunk_rows=CHUNK_R):
    if reduction not in ("mean", "sum"):
        # TODO(synk): reduction='none' (per-element output) not implemented in
        # the fused-reduction kernel path.
        raise NotImplementedError("only 'mean' and 'sum' reductions supported")

    x = inputs.reshape(-1)     # keep native dtypes; kernel upcasts to f32
    t = target.reshape(-1)
    n = x.shape[0]
    if n == 0:                 # degenerate input guard
        return (jnp.float32(float("nan")) if reduction == "mean"
                else jnp.float32(0.0))

    lane_pad = (-n) % LANE
    rows = (n + lane_pad) // LANE
    sub = max(_sublane_multiple(x.dtype), _sublane_multiple(t.dtype))

    if rows <= max_tile_rows:
        # Single block covering the whole (padded) array; no in-kernel mask.
        rows_padded = _round_up(rows, sub)
        tile_r = rows_padded
    else:
        rows_padded = rows
        tile_r = _round_up(max_tile_rows, sub)

    host_pad = rows_padded * LANE - n
    if host_pad:
        # Only when n % 128 != 0 or for sub-one-block inputs (tiny).
        # TODO(synk): a manual-DMA flat-stream path would avoid this O(n) pad
        # for huge tensors whose element count is not a multiple of 128.
        x = jnp.pad(x, (0, host_pad))
        t = jnp.pad(t, (0, host_pad))
    x2 = x.reshape(rows_padded, LANE)
    t2 = t.reshape(rows_padded, LANE)

    num_blocks = pl.cdiv(rows_padded, tile_r)
    covered = num_blocks * tile_r * LANE          # elements touched by the grid
    ragged = (num_blocks * tile_r) != rows_padded

    chunk_r = min(tile_r, _round_up(max(8, min(chunk_rows, tile_r)), 8))
    kernel = _make_kernel(tile_r, chunk_r, rows_padded, ragged)

    in_spec = pl.BlockSpec((tile_r, LANE), lambda i: (i, 0))
    out_spec = pl.BlockSpec((3, 8, LANE), lambda i: (0, 0, 0))

    # Cover the double-buffered input blocks + headroom for chunk intermediates.
    in_bytes = 2 * tile_r * LANE * (x2.dtype.itemsize + t2.dtype.itemsize)
    vmem_limit = int(min(56 << 20, max(32 << 20, in_bytes + (8 << 20))))

    partials = pl.pallas_call(
        kernel,
        out_shape=jax.ShapeDtypeStruct((3, 8, LANE), jnp.float32),
        grid=(num_blocks,),
        in_specs=[in_spec, in_spec],
        out_specs=out_spec,
        compiler_params=pltpu.CompilerParams(
            dimension_semantics=("arbitrary",),
            vmem_limit_bytes=vmem_limit,
        ),
    )(x2, t2)

    sums = jnp.sum(partials, axis=(1, 2))         # (pos_count, S1, S2)

    # Every element beyond the true n (host zero-pad or in-kernel masked rows)
    # contributed exactly ln(2) to S1 and 0 to S2 / pos_count.
    # Note: counts / divisor are f32; exact only up to n ~ 2^24 vs int64 PyTorch.
    total = jnp.float32(n)
    pos = sums[0]
    neg = total - pos
    s1 = sums[1] - jnp.float32(covered - n) * jnp.float32(LN2)
    s2 = sums[2]

    pos_weight = (total + 1.0) / (pos + 1.0)
    neg_weight = (total + 1.0) / (neg + 1.0)

    loss_sum = neg_weight * (s1 + (pos_weight - 1.0) * s2)
    if reduction == "mean":
        return loss_sum / total
    return loss_sum


def _reference_loss(x, t, reduction="mean"):
    x = x.astype(jnp.float32).reshape(-1)
    t = t.astype(jnp.float32).reshape(-1)
    pos = jnp.sum(t != 0).astype(jnp.float32)
    neg = jnp.sum(t == 0).astype(jnp.float32)
    pw = (pos + neg + 1.0) / (pos + 1.0)
    nw = (pos + neg + 1.0) / (neg + 1.0)
    sp = jnp.logaddexp(0.0, -x)  # softplus(-x)
    loss = nw * ((1.0 - t) * x + (1.0 + (pw - 1.0) * t) * sp)
    return jnp.mean(loss) if reduction == "mean" else jnp.sum(loss)


if __name__ == "__main__":
    key = jax.random.PRNGKey(0)
    k1, k2, k3, k4 = jax.random.split(key, 4)

    # Case 1: NCHW-style logits and {0,1} target, single-block fast path.
    x1 = jax.random.normal(k1, (2, 4, 16, 16), dtype=jnp.float32)
    t1 = (jax.random.uniform(k2, (2, 4, 16, 16)) > 0.7).astype(jnp.float32)
    for red in ("mean", "sum"):
        out = jax.block_until_ready(w_bce_with_logits_loss(x1, t1, reduction=red))
        ref = jax.block_until_ready(_reference_loss(x1, t1, reduction=red))
        assert jnp.allclose(out, ref, rtol=1e-5, atol=1e-5), (red, out, ref)

    # Case 2: still small, but tiny tile knobs force the multi-block grid,
    # ragged last block, in-kernel row masking and fori chunk loop paths.
    x2 = jax.random.normal(k3, (2, 4, 18, 16), dtype=jnp.float32)
    t2 = (jax.random.uniform(k4, (2, 4, 18, 16)) > 0.6).astype(jnp.float32)
    out = jax.block_until_ready(
        w_bce_with_logits_loss(x2, t2, reduction="mean",
                               max_tile_rows=16, chunk_rows=8))
    ref = jax.block_until_ready(_reference_loss(x2, t2, reduction="mean"))
    assert jnp.allclose(out, ref, rtol=1e-5, atol=1e-5), (out, ref)

    print("KERNEL_OK")
</pallas_src>

<mosaic_0001>
module attributes {stable_mosaic.version = 11 : i64} {
  func.func @kernel(%arg0: i32, %arg1: memref<16x128xf32, #tpu.memory_space<vmem>>, %arg2: memref<16x128xf32, #tpu.memory_space<vmem>>, %arg3: memref<3x8x128xf32, #tpu.memory_space<vmem>>) attributes {dimension_semantics = [#tpu.dimension_semantics<arbitrary>], iteration_bounds = array<i64: 1>, scalar_prefetch = 0 : i64, scratch_operands = 0 : i64, tpu.core_type = #tpu.core_type<tc>, window_params = [{transform_indices = @transform_0, window_bounds = array<i64: 16, 128>}, {transform_indices = @transform_1, window_bounds = array<i64: 16, 128>}, {pipeline_mode = #tpu.pipeline_mode<synchronous>, transform_indices = @transform_2, window_bounds = array<i64: 3, 8, 128>}]} {
    %c0_i32 = arith.constant 0 : i32
    %0 = arith.cmpi eq, %arg0, %c0_i32 : i32
    %1 = arith.extui %0 : i1 to i32
    %c0_i32_0 = arith.constant 0 : i32
    %2 = arith.cmpi ne, %1, %c0_i32_0 : i32
    scf.if %2 {
      %cst_28 = arith.constant 0.000000e+00 : f32
      %53 = vector.broadcast %cst_28 : f32 to vector<3x8x128xf32>
      %c0_29 = arith.constant 0 : index
      %c0_30 = arith.constant 0 : index
      %c0_31 = arith.constant 0 : index
      %54 = vector.load %arg3[%c0_29, %c0_30, %c0_31] : memref<3x8x128xf32, #tpu.memory_space<vmem>>, vector<3x8x128xf32>
      tpu.vector_store %arg3[%c0_29, %c0_30, %c0_31], %53 {strides = array<i32>} : memref<3x8x128xf32, #tpu.memory_space<vmem>>, vector<3x8x128xf32>,
    } else {
    }
    %c0_i32_1 = arith.constant 0 : i32
    %c16_i32 = arith.constant 16 : i32
    %3 = arith.muli %c0_i32_1, %c16_i32 : i32
    %4 = tpu.assume_multiple %3, 16 : i32
    %5 = arith.index_cast %4 : i32 to index
    %c0 = arith.constant 0 : index
    %6 = vector.load %arg1[%5, %c0] : memref<16x128xf32, #tpu.memory_space<vmem>>, vector<16x128xf32>
    %7 = arith.index_cast %4 : i32 to index
    %c0_2 = arith.constant 0 : index
    %8 = vector.load %arg2[%7, %c0_2] : memref<16x128xf32, #tpu.memory_space<vmem>>, vector<16x128xf32>
    %cst = arith.constant 0.000000e+00 : f32
    %9 = vector.broadcast %cst : f32 to vector<16x128xf32>
    %10 = arith.subf %9, %6 : vector<16x128xf32>
    %cst_3 = arith.constant 0.000000e+00 : f32
    %11 = vector.broadcast %cst_3 : f32 to vector<16x128xf32>
    %12 = arith.maximumf %10, %11 : vector<16x128xf32>
    %13 = math.absf %6 : vector<16x128xf32>
    %cst_4 = arith.constant 0.000000e+00 : f32
    %14 = vector.broadcast %cst_4 : f32 to vector<16x128xf32>
    %15 = arith.subf %14, %13 : vector<16x128xf32>
    %16 = math.exp %15 : vector<16x128xf32>
    %17 = math.log1p %16 : vector<16x128xf32>
    %18 = arith.addf %12, %17 : vector<16x128xf32>
    %cst_5 = arith.constant 0.000000e+00 : f32
    %19 = vector.broadcast %cst_5 : f32 to vector<16x128xf32>
    %20 = arith.cmpf one, %8, %19 : vector<16x128xf32>
    %cst_6 = arith.constant 1.000000e+00 : f32
    %cst_7 = arith.constant 0.000000e+00 : f32
    %21 = vector.broadcast %cst_6 : f32 to vector<16x128xf32>
    %22 = vector.broadcast %cst_7 : f32 to vector<16x128xf32>
    %23 = arith.select %20, %21, %22 : vector<16x128xi1>, vector<16x128xf32>
    %cst_8 = arith.constant 1.000000e+00 : f32
    %24 = vector.broadcast %cst_8 : f32 to vector<16x128xf32>
    %25 = arith.subf %24, %8 : vector<16x128xf32>
    %26 = arith.mulf %25, %6 : vector<16x128xf32>
    %27 = arith.addf %26, %18 : vector<16x128xf32>
    %28 = arith.mulf %8, %18 : vector<16x128xf32>
    %c0_9 = arith.constant 0 : index
    %c0_10 = arith.constant 0 : index
    %c0_11 = arith.constant 0 : index
    %29 = vector.load %arg3[%c0_9, %c0_10, %c0_11] : memref<3x8x128xf32, #tpu.memory_space<vmem>>, vector<1x8x128xf32>
    %30 = vector.shape_cast %29 : vector<1x8x128xf32> to vector<8x128xf32>
    %31 = vector.shape_cast %23 : vector<16x128xf32> to vector<2x8x128xf32>
    %cst_12 = arith.constant dense<0.000000e+00> : vector<8x128xf32>
    %32 = vector.multi_reduction <add>, %31, %cst_12 [0] : vector<2x8x128xf32> to vector<8x128xf32>
    %33 = arith.addf %30, %32 : vector<8x128xf32>
    %c0_13 = arith.constant 0 : index
    %c0_14 = arith.constant 0 : index
    %c0_15 = arith.constant 0 : index
    %34 = vector.load %arg3[%c0_13, %c0_14, %c0_15] : memref<3x8x128xf32, #tpu.memory_space<vmem>>, vector<1x8x128xf32>
    %35 = vector.shape_cast %34 : vector<1x8x128xf32> to vector<8x128xf32>
    %36 = vector.shape_cast %33 : vector<8x128xf32> to vector<1x8x128xf32>
    tpu.vector_store %arg3[%c0_13, %c0_14, %c0_15], %36 {strides = array<i32>} : memref<3x8x128xf32, #tpu.memory_space<vmem>>, vector<1x8x128xf32>,
    %c1 = arith.constant 1 : index
    %c0_16 = arith.constant 0 : index
    %c0_17 = arith.constant 0 : index
    %37 = vector.load %arg3[%c1, %c0_16, %c0_17] : memref<3x8x128xf32, #tpu.memory_space<vmem>>, vector<1x8x128xf32>
    %38 = vector.shape_cast %37 : vector<1x8x128xf32> to vector<8x128xf32>
    %39 = vector.shape_cast %27 : vector<16x128xf32> to vector<2x8x128xf32>
    %cst_18 = arith.constant dense<0.000000e+00> : vector<8x128xf32>
    %40 = vector.multi_reduction <add>, %39, %cst_18 [0] : vector<2x8x128xf32> to vector<8x128xf32>
    %41 = arith.addf %38, %40 : vector<8x128xf32>
    %c1_19 = arith.constant 1 : index
    %c0_20 = arith.constant 0 : index
    %c0_21 = arith.constant 0 : index
    %42 = vector.load %arg3[%c1_19, %c0_20, %c0_21] : memref<3x8x128xf32, #tpu.memory_space<vmem>>, vector<1x8x128xf32>
    %43 = vector.shape_cast %42 : vector<1x8x128xf32> to vector<8x128xf32>
    %44 = vector.shape_cast %41 : vector<8x128xf32> to vector<1x8x128xf32>
    tpu.vector_store %arg3[%c1_19, %c0_20, %c0_21], %44 {strides = array<i32>} : memref<3x8x128xf32, #tpu.memory_space<vmem>>, vector<1x8x128xf32>,
    %c2 = arith.constant 2 : index
    %c0_22 = arith.constant 0 : index
    %c0_23 = arith.constant 0 : index
    %45 = vector.load %arg3[%c2, %c0_22, %c0_23] : memref<3x8x128xf32, #tpu.memory_space<vmem>>, vector<1x8x128xf32>
    %46 = vector.shape_cast %45 : vector<1x8x128xf32> to vector<8x128xf32>
    %47 = vector.shape_cast %28 : vector<16x128xf32> to vector<2x8x128xf32>
    %cst_24 = arith.constant dense<0.000000e+00> : vector<8x128xf32>
    %48 = vector.multi_reduction <add>, %47, %cst_24 [0] : vector<2x8x128xf32> to vector<8x128xf32>
    %49 = arith.addf %46, %48 : vector<8x128xf32>
    %c2_25 = arith.constant 2 : index
    %c0_26 = arith.constant 0 : index
    %c0_27 = arith.constant 0 : index
    %50 = vector.load %arg3[%c2_25, %c0_26, %c0_27] : memref<3x8x128xf32, #tpu.memory_space<vmem>>, vector<1x8x128xf32>
    %51 = vector.shape_cast %50 : vector<1x8x128xf32> to vector<8x128xf32>
    %52 = vector.shape_cast %49 : vector<8x128xf32> to vector<1x8x128xf32>
    tpu.vector_store %arg3[%c2_25, %c0_26, %c0_27], %52 {strides = array<i32>} : memref<3x8x128xf32, #tpu.memory_space<vmem>>, vector<1x8x128xf32>,
    %c1_i32 = arith.constant 1 : i32
    return
  }
  func.func @transform_0(%arg0: i32) -> (i32, i32) {
    %c0_i32 = arith.constant 0 : i32
    %c0_i32_0 = arith.constant 0 : i32
    return %arg0, %c0_i32 : i32, i32
  }
  func.func @transform_1(%arg0: i32) -> (i32, i32) {
    %c0_i32 = arith.constant 0 : i32
    %c0_i32_0 = arith.constant 0 : i32
    return %arg0, %c0_i32 : i32, i32
  }
  func.func @transform_2(%arg0: i32) -> (i32, i32, i32) {
    %c0_i32 = arith.constant 0 : i32
    %c0_i32_0 = arith.constant 0 : i32
    %c0_i32_1 = arith.constant 0 : i32
    %c0_i32_2 = arith.constant 0 : i32
    return %c0_i32, %c0_i32_0, %c0_i32_1 : i32, i32, i32
  }
}

</mosaic_0001>

<llo_original>
// kernel: w_bce_with_logits_loss.1
$region0: #{w_bce_with_logits_loss.1}
  #allocation0 [shape = 'u32[]', space=smem, size = 0x4, offset = 0x4, fixed_abs, tag = 'smem constant byte address 0x4 - core index']
  #allocation1 [shape = 'u32[144,128]{1,0:T(1,128)}', space=vmem, size = 0x12000, scoped, tag = 'internal scratch']
  %s0 = inlined_call_operand.vmem [shape: f32[16,128], index: 0, kind: input, shape index: {}]
  %s1 = inlined_call_operand.vmem [shape: f32[16,128], index: 1, kind: input, shape index: {}]
  %s2 = inlined_call_operand.vmem [shape: f32[3,8,128], index: 2, kind: output, shape index: {}]
  %s3 = sld [smem:[#allocation0]]
  $region22: #{w_bce_with_logits_loss.1} parent=0
    _
  %s5 = ssub.s32 1, %s3
  %s6 = scalar_select 0, %s5, %s3
  // Predicated region
  $region2: #{w_bce_with_logits_loss.1} parent=0 // pred_check
    _
  $region3: #{w_bce_with_logits_loss.1} parent=0 // pred_check_branch
    %8 = sbr.rel (0) target = $region5
  $region4: #{w_bce_with_logits_loss.1} parent=0 // pred_region
    _
  $region5: #{w_bce_with_logits_loss.1} parent=0 // pred_fallthru
    _
  // Predicated region
  $region6: #{w_bce_with_logits_loss.1} parent=0 // pred_check
    _
  $region7: #{w_bce_with_logits_loss.1} parent=0 // pred_check_branch
    %10 = sbr.rel (0) target = $region9
  $region8: #{w_bce_with_logits_loss.1} parent=0 // pred_region
    _
  $region9: #{w_bce_with_logits_loss.1} parent=0 // pred_fallthru
    _
  %p11 = scmp.eq.s32.totalorder 0, 0
  // Predicated region
  $region10: #{w_bce_with_logits_loss.1} parent=0 // pred_check
    %p12 = pneg %p11
  $region11: #{w_bce_with_logits_loss.1} parent=0 // pred_check_branch
    %14 = sbr.rel (%p12) target = $region13
  $region12: #{w_bce_with_logits_loss.1} parent=0 // pred_region
    %15 = vst [vmem:[%s2] sm:$0xff] 0.0
    %16 = vst [vmem:[%s2 + $0x8] sm:$0xff] 0.0
    %17 = vst [vmem:[%s2 + $0x10] sm:$0xff] 0.0
  $region13: #{w_bce_with_logits_loss.1} parent=0 // pred_fallthru
    _
  %v18 = vld [vmem:[%s0] sm:$0xff]
  %v19 = vld [vmem:[%s0 + $0x8] sm:$0xff]
  %v20 = vld [vmem:[%s1] sm:$0xff]
  %v21 = vld [vmem:[%s1 + $0x8] sm:$0xff]
  %v22 = vsub.f32 0.0, %v18
  %v23 = vsub.f32 0.0, %v19
  %v24 = vmax.f32 %v22, 0.0
  %v25 = vmax.f32 %v23, 0.0
  %v26 = vand.u32 2147483647, %v18
  %v27 = vand.u32 2147483647, %v19
  %v28 = vsub.f32 0.0, %v26
  %v29 = vsub.f32 0.0, %v27
  %v30 = vmul.f32 %v28, 1.442695
  %v31 = vpow.pop %v30
  %v32 = vmul.f32 %v29, 1.442695
  %v33 = vpow.pop %v32
  %v34 = vadd.f32 %v31, 1.0
  %v35 = vlog2.pop %v34
  %v36 = vmul.f32 %v35, 0.6931472
  %v37 = vmul.f32 -0.5, %v31
  %v38 = vadd.f32 %v37, 1.0
  %v39 = vmul.f32 %v38, %v31
  %v40 = vand.u32 2147483647, %v31
  %vm41 = vcmp.lt.f32.partialorder %v40, 0.0004427343
  %v42 = vsel %vm41, %v39, %v36
  %v43 = vadd.f32 %v33, 1.0
  %v44 = vlog2.pop %v43
  %v45 = vmul.f32 %v44, 0.6931472
  %v46 = vmul.f32 -0.5, %v33
  %v47 = vadd.f32 %v46, 1.0
  %v48 = vmul.f32 %v47, %v33
  %v49 = vand.u32 2147483647, %v33
  %vm50 = vcmp.lt.f32.partialorder %v49, 0.0004427343
  %v51 = vsel %vm50, %v48, %v45
  %v52 = vadd.f32 %v24, %v42
  %v53 = vadd.f32 %v25, %v51
  %vm54 = vcmp.ne.f32.partialorder %v20, 0.0
  %vm55 = vcmp.ne.f32.partialorder %v21, 0.0
  %v56 = vsel %vm54, 1.0, 0.0
  %v57 = vsel %vm55, 1.0, 0.0
  %v58 = vsub.f32 1.0, %v20
  %v59 = vsub.f32 1.0, %v21
  %v60 = vmul.f32 %v58, %v18
  %v61 = vmul.f32 %v59, %v19
  %v62 = vadd.f32 %v60, %v52
  %v63 = vadd.f32 %v61, %v53
  %v64 = vmul.f32 %v20, %v52
  %v65 = vmul.f32 %v21, %v53
  %v66 = vld [vmem:[%s2] sm:$0xff]
  %v67 = vadd.f32 %v56, %v57
  %v68 = vadd.f32 %v66, %v67
  %69 = vst [vmem:[%s2] sm:$0xff] %v68
  %s70 = scalar_lea.vmem %s2, 8
  %v71 = vld [vmem:[%s70] sm:$0xff]
  %v72 = vadd.f32 %v62, %v63
  %v73 = vadd.f32 %v71, %v72
  %74 = vst [vmem:[%s70] sm:$0xff] %v73
  %s75 = scalar_lea.vmem %s2, 16
  %v76 = vld [vmem:[%s75] sm:$0xff]
  %v77 = vadd.f32 %v64, %v65
  %v78 = vadd.f32 %v76, %v77
  %79 = vst [vmem:[%s75] sm:$0xff] %v78
  // Predicated region
  $region14: #{w_bce_with_logits_loss.1} parent=0 // pred_check
    _
  $region15: #{w_bce_with_logits_loss.1} parent=0 // pred_check_branch
    %81 = sbr.rel (0) target = $region17
  $region16: #{w_bce_with_logits_loss.1} parent=0 // pred_region
    _
  $region17: #{w_bce_with_logits_loss.1} parent=0 // pred_fallthru
    _
  // Predicated region
  $region18: #{w_bce_with_logits_loss.1} parent=0 // pred_check
    _
  $region19: #{w_bce_with_logits_loss.1} parent=0 // pred_check_branch
    %83 = sbr.rel (0) target = $region21
  $region20: #{w_bce_with_logits_loss.1} parent=0 // pred_region
    _
  $region21: #{w_bce_with_logits_loss.1} parent=0 // pred_fallthru
    _

</llo_original>
